<compile_context>
chip_gen: v5e
topology: v5e:2x2
jax: 0.10.0
libtpu: 0.0.40
codegen_flags: <defaults>
</compile_context>

<pallas_src>
import numpy as np
import jax
import jax.numpy as jnp
from jax.experimental import pallas as pl
from jax.experimental.pallas import tpu as pltpu

IN_CHANNELS = 4
NUM_ACTIONS = 6
H = W = 10
K = 3
OH = OW = H - K + 1            # 8   (size_linear_unit(10) = 8)
CONV_OUT = 16
BAND_N = CONV_OUT * OW         # 128 : one band's conv outputs, col = o*8 + ow
NUM_LINEAR = CONV_OUT * OH * OW  # 1024
HIDDEN = 128
OUT_LANES = 128                # padded lane width of the Q-value output slab
MAX_TB = 128                   # batch rows per grid step


def _round_up(v, m):
    return ((v + m - 1) // m) * m


# ---------------- Pallas kernel (fully fused forward) ----------------

def qnet_fused_kernel(xb_ref, cw_ref, cb_ref, w1_ref, b1_ref, w2_ref, b2_ref, o_ref):
    # xb_ref: (OH, tb, band_lanes) bf16  -- input rows oh..oh+2 flattened per band
    # cw_ref: (band_lanes, 128)   bf16  -- 3x3 conv as a band matrix (shared by all oh)
    # cb_ref: (1, 128)            f32   -- conv bias per (o, ow)
    # w1_ref: (OH, 128, HIDDEN)   bf16  -- fc_hidden weight regrouped per band
    # b1_ref: (1, HIDDEN) f32, w2_ref: (HIDDEN, 128) bf16 (cols>=A zero), b2_ref: (1,128) f32
    # o_ref : (tb, 128) f32
    tb = xb_ref.shape[1]
    acc = jnp.zeros((tb, HIDDEN), jnp.float32)
    for oh in range(OH):                                   # 8 bands, fully unrolled
        h1 = jnp.dot(xb_ref[oh], cw_ref[...], preferred_element_type=jnp.float32)
        h1 = jnp.maximum(h1 + cb_ref[...], 0.0)            # conv + bias + ReLU (f32)
        acc = acc + jnp.dot(h1.astype(jnp.bfloat16), w1_ref[oh],
                            preferred_element_type=jnp.float32)
    h2 = jnp.maximum(acc + b1_ref[...], 0.0)               # fc_hidden bias + ReLU (f32)
    o_ref[...] = jnp.dot(h2.astype(jnp.bfloat16), w2_ref[...],
                         preferred_element_type=jnp.float32) + b2_ref[...]


# ---------------- One-time weight re-layout (outside the jitted forward) ----------------

def prepare_params(params):
    wc = np.asarray(params["wc"], np.float32)   # (16, cin, 3, 3)
    bc = np.asarray(params["bc"], np.float32)   # (16,)
    w1 = np.asarray(params["w1"], np.float32)   # (128, 1024), input idx j = o*64 + oh*8 + ow
    b1 = np.asarray(params["b1"], np.float32)   # (128,)
    w2 = np.asarray(params["w2"], np.float32)   # (A, 128)
    b2 = np.asarray(params["b2"], np.float32)   # (A,)
    cin = wc.shape[1]
    num_actions = w2.shape[0]

    band_k = K * cin * W                        # 120 for cin=4 : row = kh*cin*W + c*W + iw
    band_lanes = _round_up(band_k, 128)

    # Band conv matrix, identical for every output row oh:
    #   cw[kh*cin*W + c*W + iw, o*OW + ow] = wc[o, c, kh, iw - ow]   (when 0 <= iw-ow < K)
    o, c, kh, kw, ow = np.meshgrid(np.arange(CONV_OUT), np.arange(cin), np.arange(K),
                                   np.arange(K), np.arange(OW), indexing="ij")
    rows = kh * (cin * W) + c * W + (ow + kw)
    cols = o * OW + ow
    cw = np.zeros((band_lanes, BAND_N), np.float32)
    cw[rows.ravel(), cols.ravel()] = wc[o, c, kh, kw].ravel()

    cb = np.repeat(bc, OW).reshape(1, BAND_N)                       # bias per col o*8+ow

    # fc_hidden weight regrouped per band: w1b[oh, o*OW+ow, h] = w1[h, o*64 + oh*8 + ow]
    w1_r = w1.reshape(HIDDEN, CONV_OUT, OH, OW)
    w1b = np.transpose(w1_r, (2, 1, 3, 0)).reshape(OH, BAND_N, HIDDEN)

    # Output head, zero-padded to a lane-dense 128-wide slab.
    w2p = np.zeros((HIDDEN, OUT_LANES), np.float32)
    w2p[:, :num_actions] = w2.T
    b2p = np.zeros((1, OUT_LANES), np.float32)
    b2p[0, :num_actions] = b2

    return {
        "conv_w": jnp.asarray(cw, jnp.bfloat16),      # (band_lanes, 128)
        "conv_b": jnp.asarray(cb, jnp.float32),       # (1, 128)
        "w1b":    jnp.asarray(w1b, jnp.bfloat16),     # (OH, 128, 128)
        "b1":     jnp.asarray(b1.reshape(1, HIDDEN), jnp.float32),
        "w2p":    jnp.asarray(w2p, jnp.bfloat16),     # (128, 128)
        "b2p":    jnp.asarray(b2p, jnp.float32),      # (1, 128)
    }


# ---------------- Forward (single pallas_call, batch-tiled grid) ----------------

def qnetwork_forward(x, prep, num_actions=NUM_ACTIONS):
    B, cin = x.shape[0], x.shape[1]
    band_k = K * cin * W
    band_lanes = prep["conv_w"].shape[0]

    # Batch tile: >=2 parallel grid steps when possible (v7x has 2 TCs), multiple of 8.
    tb = min(MAX_TB, max(8, _round_up(pl.cdiv(B, 2), 8)))
    Bp = _round_up(B, tb)
    grid = (Bp // tb,)

    # Per-output-row band layout of the input (lane-dense, 128-aligned MXU operand):
    #   xb[oh, b, kh*cin*W + c*W + iw] = x[b, c, oh+kh, iw]
    xt = jnp.transpose(x, (0, 2, 1, 3)).reshape(B, H, cin * W)      # (B, 10, cin*10)
    bands = jnp.stack([xt[:, oh:oh + K, :].reshape(B, band_k) for oh in range(OH)],
                      axis=0)                                       # (OH, B, band_k)
    xb = jnp.pad(bands, ((0, 0), (0, Bp - B), (0, band_lanes - band_k))
                 ).astype(jnp.bfloat16)                             # (OH, Bp, band_lanes)

    const2 = lambda i: (0, 0)          # weights/biases: same block every step -> resident
    const3 = lambda i: (0, 0, 0)

    out = pl.pallas_call(
        qnet_fused_kernel,
        out_shape=jax.ShapeDtypeStruct((Bp, OUT_LANES), jnp.float32),
        grid=grid,
        in_specs=[
            pl.BlockSpec((OH, tb, band_lanes), lambda i: (0, i, 0)),   # banded input rows
            pl.BlockSpec((band_lanes, BAND_N), const2),                # band conv weight
            pl.BlockSpec((1, BAND_N), const2),                         # conv bias
            pl.BlockSpec((OH, BAND_N, HIDDEN), const3),                # fc_hidden per band
            pl.BlockSpec((1, HIDDEN), const2),                         # fc_hidden bias
            pl.BlockSpec((HIDDEN, OUT_LANES), const2),                 # output head (padded)
            pl.BlockSpec((1, OUT_LANES), const2),                      # output bias (padded)
        ],
        out_specs=pl.BlockSpec((tb, OUT_LANES), lambda i: (i, 0)),
        compiler_params=pltpu.CompilerParams(dimension_semantics=("parallel",)),
    )(xb, prep["conv_w"], prep["conv_b"], prep["w1b"], prep["b1"], prep["w2p"], prep["b2p"])

    return out[:B, :num_actions]


# ---------------- Pure-JAX reference (for validation) ----------------

def qnetwork_reference(x, params):
    conv = jax.lax.conv_general_dilated(
        x, params["wc"], window_strides=(1, 1), padding="VALID",
        dimension_numbers=("NCHW", "OIHW", "NCHW"))
    conv = jax.nn.relu(conv + params["bc"].reshape(1, CONV_OUT, 1, 1))
    flat = conv.reshape(x.shape[0], -1)
    h = jax.nn.relu(flat @ params["w1"].T + params["b1"])
    return h @ params["w2"].T + params["b2"]


# ---------------- Deterministic parameter init (PyTorch-style uniform) ----------------

def init_params(key, in_channels, num_actions):
    ks = jax.random.split(key, 6)

    def u(k, shape, fan_in):
        bound = 1.0 / jnp.sqrt(jnp.float32(fan_in))
        return jax.random.uniform(k, shape, jnp.float32, -bound, bound)

    return {
        "wc": u(ks[0], (CONV_OUT, in_channels, K, K), in_channels * K * K),
        "bc": u(ks[1], (CONV_OUT,), in_channels * K * K),
        "w1": u(ks[2], (HIDDEN, NUM_LINEAR), NUM_LINEAR),
        "b1": u(ks[3], (HIDDEN,), NUM_LINEAR),
        "w2": u(ks[4], (num_actions, HIDDEN), HIDDEN),
        "b2": u(ks[5], (num_actions,), HIDDEN),
    }


if __name__ == "__main__":
    key = jax.random.PRNGKey(0)
    k_param, k_x = jax.random.split(key)

    params = init_params(k_param, IN_CHANNELS, NUM_ACTIONS)
    prep = prepare_params(params)                                    # one-time, outside jit
    x = jax.random.normal(k_x, (2, IN_CHANNELS, H, W), jnp.float32)  # batch=2, NCHW 4x10x10

    fwd = jax.jit(qnetwork_forward)
    out = jax.block_until_ready(fwd(x, prep))
    ref = jax.block_until_ready(qnetwork_reference(x, params))

    assert out.shape == (2, NUM_ACTIONS)
    # bf16 weights/activations vs f32 reference -> loosened tolerance (feedback concern #3).
    assert jnp.allclose(out, ref, atol=2e-2, rtol=2e-2), (
        f"Pallas output mismatch vs reference, max abs diff {jnp.max(jnp.abs(out - ref))}")

    print("KERNEL_OK")
</pallas_src>

<mosaic_0001>
module attributes {stable_mosaic.version = 11 : i64} {
  func.func @qnet_fused_kernel(%arg0: i32, %arg1: memref<8x8x128xbf16, #tpu.memory_space<vmem>>, %arg2: memref<128x128xbf16, #tpu.memory_space<vmem>>, %arg3: memref<1x128xf32, #tpu.memory_space<vmem>>, %arg4: memref<8x128x128xbf16, #tpu.memory_space<vmem>>, %arg5: memref<1x128xf32, #tpu.memory_space<vmem>>, %arg6: memref<128x128xbf16, #tpu.memory_space<vmem>>, %arg7: memref<1x128xf32, #tpu.memory_space<vmem>>, %arg8: memref<8x128xf32, #tpu.memory_space<vmem>>) attributes {dimension_semantics = [#tpu.dimension_semantics<parallel>], iteration_bounds = array<i64: 1>, scalar_prefetch = 0 : i64, scratch_operands = 0 : i64, tpu.core_type = #tpu.core_type<tc>, window_params = [{transform_indices = @transform_0, window_bounds = array<i64: 8, 8, 128>}, {pipeline_mode = #tpu.pipeline_mode<synchronous>, transform_indices = @transform_1, window_bounds = array<i64: 128, 128>}, {pipeline_mode = #tpu.pipeline_mode<synchronous>, transform_indices = @transform_2, window_bounds = array<i64: 1, 128>}, {pipeline_mode = #tpu.pipeline_mode<synchronous>, transform_indices = @transform_3, window_bounds = array<i64: 8, 128, 128>}, {pipeline_mode = #tpu.pipeline_mode<synchronous>, transform_indices = @transform_4, window_bounds = array<i64: 1, 128>}, {pipeline_mode = #tpu.pipeline_mode<synchronous>, transform_indices = @transform_5, window_bounds = array<i64: 128, 128>}, {pipeline_mode = #tpu.pipeline_mode<synchronous>, transform_indices = @transform_6, window_bounds = array<i64: 1, 128>}, {transform_indices = @transform_7, window_bounds = array<i64: 8, 128>}]} {
    %cst = arith.constant 0.000000e+00 : f32
    %0 = vector.broadcast %cst : f32 to vector<8x128xf32>
    %c0 = arith.constant 0 : index
    %c0_0 = arith.constant 0 : index
    %c0_1 = arith.constant 0 : index
    %1 = vector.load %arg1[%c0, %c0_0, %c0_1] : memref<8x8x128xbf16, #tpu.memory_space<vmem>>, vector<1x8x128xbf16>
    %2 = vector.shape_cast %1 : vector<1x8x128xbf16> to vector<8x128xbf16>
    %c0_2 = arith.constant 0 : index
    %c0_3 = arith.constant 0 : index
    %3 = vector.load %arg2[%c0_2, %c0_3] : memref<128x128xbf16, #tpu.memory_space<vmem>>, vector<128x128xbf16>
    %cst_4 = arith.constant dense<0.000000e+00> : vector<8x128xf32>
    %4 = tpu.matmul %2, %3, %cst_4 {dimension_numbers = #tpu.dot_dimension_numbers<[1], [0], [0], [1], [0, 0, 1, 1], [], []>} : vector<8x128xbf16>, vector<128x128xbf16>, vector<8x128xf32> -> vector<8x128xf32>
    %c0_5 = arith.constant 0 : index
    %c0_6 = arith.constant 0 : index
    %5 = vector.load %arg3[%c0_5, %c0_6] : memref<1x128xf32, #tpu.memory_space<vmem>>, vector<1x128xf32>
    %6 = vector.broadcast %5 : vector<1x128xf32> to vector<8x128xf32>
    %7 = arith.addf %4, %6 : vector<8x128xf32>
    %cst_7 = arith.constant 0.000000e+00 : f32
    %8 = vector.broadcast %cst_7 : f32 to vector<8x128xf32>
    %9 = arith.maximumf %7, %8 : vector<8x128xf32>
    %10 = arith.truncf %9 : vector<8x128xf32> to vector<8x128xbf16>
    %c0_8 = arith.constant 0 : index
    %c0_9 = arith.constant 0 : index
    %c0_10 = arith.constant 0 : index
    %11 = vector.load %arg4[%c0_8, %c0_9, %c0_10] : memref<8x128x128xbf16, #tpu.memory_space<vmem>>, vector<1x128x128xbf16>
    %12 = vector.shape_cast %11 : vector<1x128x128xbf16> to vector<128x128xbf16>
    %cst_11 = arith.constant dense<0.000000e+00> : vector<8x128xf32>
    %13 = tpu.matmul %10, %12, %cst_11 {dimension_numbers = #tpu.dot_dimension_numbers<[1], [0], [0], [1], [0, 0, 1, 1], [], []>} : vector<8x128xbf16>, vector<128x128xbf16>, vector<8x128xf32> -> vector<8x128xf32>
    %14 = arith.addf %0, %13 : vector<8x128xf32>
    %c1 = arith.constant 1 : index
    %c0_12 = arith.constant 0 : index
    %c0_13 = arith.constant 0 : index
    %15 = vector.load %arg1[%c1, %c0_12, %c0_13] : memref<8x8x128xbf16, #tpu.memory_space<vmem>>, vector<1x8x128xbf16>
    %16 = vector.shape_cast %15 : vector<1x8x128xbf16> to vector<8x128xbf16>
    %c0_14 = arith.constant 0 : index
    %c0_15 = arith.constant 0 : index
    %17 = vector.load %arg2[%c0_14, %c0_15] : memref<128x128xbf16, #tpu.memory_space<vmem>>, vector<128x128xbf16>
    %cst_16 = arith.constant dense<0.000000e+00> : vector<8x128xf32>
    %18 = tpu.matmul %16, %17, %cst_16 {dimension_numbers = #tpu.dot_dimension_numbers<[1], [0], [0], [1], [0, 0, 1, 1], [], []>} : vector<8x128xbf16>, vector<128x128xbf16>, vector<8x128xf32> -> vector<8x128xf32>
    %c0_17 = arith.constant 0 : index
    %c0_18 = arith.constant 0 : index
    %19 = vector.load %arg3[%c0_17, %c0_18] : memref<1x128xf32, #tpu.memory_space<vmem>>, vector<1x128xf32>
    %20 = vector.broadcast %19 : vector<1x128xf32> to vector<8x128xf32>
    %21 = arith.addf %18, %20 : vector<8x128xf32>
    %cst_19 = arith.constant 0.000000e+00 : f32
    %22 = vector.broadcast %cst_19 : f32 to vector<8x128xf32>
    %23 = arith.maximumf %21, %22 : vector<8x128xf32>
    %24 = arith.truncf %23 : vector<8x128xf32> to vector<8x128xbf16>
    %c1_20 = arith.constant 1 : index
    %c0_21 = arith.constant 0 : index
    %c0_22 = arith.constant 0 : index
    %25 = vector.load %arg4[%c1_20, %c0_21, %c0_22] : memref<8x128x128xbf16, #tpu.memory_space<vmem>>, vector<1x128x128xbf16>
    %26 = vector.shape_cast %25 : vector<1x128x128xbf16> to vector<128x128xbf16>
    %cst_23 = arith.constant dense<0.000000e+00> : vector<8x128xf32>
    %27 = tpu.matmul %24, %26, %cst_23 {dimension_numbers = #tpu.dot_dimension_numbers<[1], [0], [0], [1], [0, 0, 1, 1], [], []>} : vector<8x128xbf16>, vector<128x128xbf16>, vector<8x128xf32> -> vector<8x128xf32>
    %28 = arith.addf %14, %27 : vector<8x128xf32>
    %c2 = arith.constant 2 : index
    %c0_24 = arith.constant 0 : index
    %c0_25 = arith.constant 0 : index
    %29 = vector.load %arg1[%c2, %c0_24, %c0_25] : memref<8x8x128xbf16, #tpu.memory_space<vmem>>, vector<1x8x128xbf16>
    %30 = vector.shape_cast %29 : vector<1x8x128xbf16> to vector<8x128xbf16>
    %c0_26 = arith.constant 0 : index
    %c0_27 = arith.constant 0 : index
    %31 = vector.load %arg2[%c0_26, %c0_27] : memref<128x128xbf16, #tpu.memory_space<vmem>>, vector<128x128xbf16>
    %cst_28 = arith.constant dense<0.000000e+00> : vector<8x128xf32>
    %32 = tpu.matmul %30, %31, %cst_28 {dimension_numbers = #tpu.dot_dimension_numbers<[1], [0], [0], [1], [0, 0, 1, 1], [], []>} : vector<8x128xbf16>, vector<128x128xbf16>, vector<8x128xf32> -> vector<8x128xf32>
    %c0_29 = arith.constant 0 : index
    %c0_30 = arith.constant 0 : index
    %33 = vector.load %arg3[%c0_29, %c0_30] : memref<1x128xf32, #tpu.memory_space<vmem>>, vector<1x128xf32>
    %34 = vector.broadcast %33 : vector<1x128xf32> to vector<8x128xf32>
    %35 = arith.addf %32, %34 : vector<8x128xf32>
    %cst_31 = arith.constant 0.000000e+00 : f32
    %36 = vector.broadcast %cst_31 : f32 to vector<8x128xf32>
    %37 = arith.maximumf %35, %36 : vector<8x128xf32>
    %38 = arith.truncf %37 : vector<8x128xf32> to vector<8x128xbf16>
    %c2_32 = arith.constant 2 : index
    %c0_33 = arith.constant 0 : index
    %c0_34 = arith.constant 0 : index
    %39 = vector.load %arg4[%c2_32, %c0_33, %c0_34] : memref<8x128x128xbf16, #tpu.memory_space<vmem>>, vector<1x128x128xbf16>
    %40 = vector.shape_cast %39 : vector<1x128x128xbf16> to vector<128x128xbf16>
    %cst_35 = arith.constant dense<0.000000e+00> : vector<8x128xf32>
    %41 = tpu.matmul %38, %40, %cst_35 {dimension_numbers = #tpu.dot_dimension_numbers<[1], [0], [0], [1], [0, 0, 1, 1], [], []>} : vector<8x128xbf16>, vector<128x128xbf16>, vector<8x128xf32> -> vector<8x128xf32>
    %42 = arith.addf %28, %41 : vector<8x128xf32>
    %c3 = arith.constant 3 : index
    %c0_36 = arith.constant 0 : index
    %c0_37 = arith.constant 0 : index
    %43 = vector.load %arg1[%c3, %c0_36, %c0_37] : memref<8x8x128xbf16, #tpu.memory_space<vmem>>, vector<1x8x128xbf16>
    %44 = vector.shape_cast %43 : vector<1x8x128xbf16> to vector<8x128xbf16>
    %c0_38 = arith.constant 0 : index
    %c0_39 = arith.constant 0 : index
    %45 = vector.load %arg2[%c0_38, %c0_39] : memref<128x128xbf16, #tpu.memory_space<vmem>>, vector<128x128xbf16>
    %cst_40 = arith.constant dense<0.000000e+00> : vector<8x128xf32>
    %46 = tpu.matmul %44, %45, %cst_40 {dimension_numbers = #tpu.dot_dimension_numbers<[1], [0], [0], [1], [0, 0, 1, 1], [], []>} : vector<8x128xbf16>, vector<128x128xbf16>, vector<8x128xf32> -> vector<8x128xf32>
    %c0_41 = arith.constant 0 : index
    %c0_42 = arith.constant 0 : index
    %47 = vector.load %arg3[%c0_41, %c0_42] : memref<1x128xf32, #tpu.memory_space<vmem>>, vector<1x128xf32>
    %48 = vector.broadcast %47 : vector<1x128xf32> to vector<8x128xf32>
    %49 = arith.addf %46, %48 : vector<8x128xf32>
    %cst_43 = arith.constant 0.000000e+00 : f32
    %50 = vector.broadcast %cst_43 : f32 to vector<8x128xf32>
    %51 = arith.maximumf %49, %50 : vector<8x128xf32>
    %52 = arith.truncf %51 : vector<8x128xf32> to vector<8x128xbf16>
    %c3_44 = arith.constant 3 : index
    %c0_45 = arith.constant 0 : index
    %c0_46 = arith.constant 0 : index
    %53 = vector.load %arg4[%c3_44, %c0_45, %c0_46] : memref<8x128x128xbf16, #tpu.memory_space<vmem>>, vector<1x128x128xbf16>
    %54 = vector.shape_cast %53 : vector<1x128x128xbf16> to vector<128x128xbf16>
    %cst_47 = arith.constant dense<0.000000e+00> : vector<8x128xf32>
    %55 = tpu.matmul %52, %54, %cst_47 {dimension_numbers = #tpu.dot_dimension_numbers<[1], [0], [0], [1], [0, 0, 1, 1], [], []>} : vector<8x128xbf16>, vector<128x128xbf16>, vector<8x128xf32> -> vector<8x128xf32>
    %56 = arith.addf %42, %55 : vector<8x128xf32>
    %c4 = arith.constant 4 : index
    %c0_48 = arith.constant 0 : index
    %c0_49 = arith.constant 0 : index
    %57 = vector.load %arg1[%c4, %c0_48, %c0_49] : memref<8x8x128xbf16, #tpu.memory_space<vmem>>, vector<1x8x128xbf16>
    %58 = vector.shape_cast %57 : vector<1x8x128xbf16> to vector<8x128xbf16>
    %c0_50 = arith.constant 0 : index
    %c0_51 = arith.constant 0 : index
    %59 = vector.load %arg2[%c0_50, %c0_51] : memref<128x128xbf16, #tpu.memory_space<vmem>>, vector<128x128xbf16>
    %cst_52 = arith.constant dense<0.000000e+00> : vector<8x128xf32>
    %60 = tpu.matmul %58, %59, %cst_52 {dimension_numbers = #tpu.dot_dimension_numbers<[1], [0], [0], [1], [0, 0, 1, 1], [], []>} : vector<8x128xbf16>, vector<128x128xbf16>, vector<8x128xf32> -> vector<8x128xf32>
    %c0_53 = arith.constant 0 : index
    %c0_54 = arith.constant 0 : index
    %61 = vector.load %arg3[%c0_53, %c0_54] : memref<1x128xf32, #tpu.memory_space<vmem>>, vector<1x128xf32>
    %62 = vector.broadcast %61 : vector<1x128xf32> to vector<8x128xf32>
    %63 = arith.addf %60, %62 : vector<8x128xf32>
    %cst_55 = arith.constant 0.000000e+00 : f32
    %64 = vector.broadcast %cst_55 : f32 to vector<8x128xf32>
    %65 = arith.maximumf %63, %64 : vector<8x128xf32>
    %66 = arith.truncf %65 : vector<8x128xf32> to vector<8x128xbf16>
    %c4_56 = arith.constant 4 : index
    %c0_57 = arith.constant 0 : index
    %c0_58 = arith.constant 0 : index
    %67 = vector.load %arg4[%c4_56, %c0_57, %c0_58] : memref<8x128x128xbf16, #tpu.memory_space<vmem>>, vector<1x128x128xbf16>
    %68 = vector.shape_cast %67 : vector<1x128x128xbf16> to vector<128x128xbf16>
    %cst_59 = arith.constant dense<0.000000e+00> : vector<8x128xf32>
    %69 = tpu.matmul %66, %68, %cst_59 {dimension_numbers = #tpu.dot_dimension_numbers<[1], [0], [0], [1], [0, 0, 1, 1], [], []>} : vector<8x128xbf16>, vector<128x128xbf16>, vector<8x128xf32> -> vector<8x128xf32>
    %70 = arith.addf %56, %69 : vector<8x128xf32>
    %c5 = arith.constant 5 : index
    %c0_60 = arith.constant 0 : index
    %c0_61 = arith.constant 0 : index
    %71 = vector.load %arg1[%c5, %c0_60, %c0_61] : memref<8x8x128xbf16, #tpu.memory_space<vmem>>, vector<1x8x128xbf16>
    %72 = vector.shape_cast %71 : vector<1x8x128xbf16> to vector<8x128xbf16>
    %c0_62 = arith.constant 0 : index
    %c0_63 = arith.constant 0 : index
    %73 = vector.load %arg2[%c0_62, %c0_63] : memref<128x128xbf16, #tpu.memory_space<vmem>>, vector<128x128xbf16>
    %cst_64 = arith.constant dense<0.000000e+00> : vector<8x128xf32>
    %74 = tpu.matmul %72, %73, %cst_64 {dimension_numbers = #tpu.dot_dimension_numbers<[1], [0], [0], [1], [0, 0, 1, 1], [], []>} : vector<8x128xbf16>, vector<128x128xbf16>, vector<8x128xf32> -> vector<8x128xf32>
    %c0_65 = arith.constant 0 : index
    %c0_66 = arith.constant 0 : index
    %75 = vector.load %arg3[%c0_65, %c0_66] : memref<1x128xf32, #tpu.memory_space<vmem>>, vector<1x128xf32>
    %76 = vector.broadcast %75 : vector<1x128xf32> to vector<8x128xf32>
    %77 = arith.addf %74, %76 : vector<8x128xf32>
    %cst_67 = arith.constant 0.000000e+00 : f32
    %78 = vector.broadcast %cst_67 : f32 to vector<8x128xf32>
    %79 = arith.maximumf %77, %78 : vector<8x128xf32>
    %80 = arith.truncf %79 : vector<8x128xf32> to vector<8x128xbf16>
    %c5_68 = arith.constant 5 : index
    %c0_69 = arith.constant 0 : index
    %c0_70 = arith.constant 0 : index
    %81 = vector.load %arg4[%c5_68, %c0_69, %c0_70] : memref<8x128x128xbf16, #tpu.memory_space<vmem>>, vector<1x128x128xbf16>
    %82 = vector.shape_cast %81 : vector<1x128x128xbf16> to vector<128x128xbf16>
    %cst_71 = arith.constant dense<0.000000e+00> : vector<8x128xf32>
    %83 = tpu.matmul %80, %82, %cst_71 {dimension_numbers = #tpu.dot_dimension_numbers<[1], [0], [0], [1], [0, 0, 1, 1], [], []>} : vector<8x128xbf16>, vector<128x128xbf16>, vector<8x128xf32> -> vector<8x128xf32>
    %84 = arith.addf %70, %83 : vector<8x128xf32>
    %c6 = arith.constant 6 : index
    %c0_72 = arith.constant 0 : index
    %c0_73 = arith.constant 0 : index
    %85 = vector.load %arg1[%c6, %c0_72, %c0_73] : memref<8x8x128xbf16, #tpu.memory_space<vmem>>, vector<1x8x128xbf16>
    %86 = vector.shape_cast %85 : vector<1x8x128xbf16> to vector<8x128xbf16>
    %c0_74 = arith.constant 0 : index
    %c0_75 = arith.constant 0 : index
    %87 = vector.load %arg2[%c0_74, %c0_75] : memref<128x128xbf16, #tpu.memory_space<vmem>>, vector<128x128xbf16>
    %cst_76 = arith.constant dense<0.000000e+00> : vector<8x128xf32>
    %88 = tpu.matmul %86, %87, %cst_76 {dimension_numbers = #tpu.dot_dimension_numbers<[1], [0], [0], [1], [0, 0, 1, 1], [], []>} : vector<8x128xbf16>, vector<128x128xbf16>, vector<8x128xf32> -> vector<8x128xf32>
    %c0_77 = arith.constant 0 : index
    %c0_78 = arith.constant 0 : index
    %89 = vector.load %arg3[%c0_77, %c0_78] : memref<1x128xf32, #tpu.memory_space<vmem>>, vector<1x128xf32>
    %90 = vector.broadcast %89 : vector<1x128xf32> to vector<8x128xf32>
    %91 = arith.addf %88, %90 : vector<8x128xf32>
    %cst_79 = arith.constant 0.000000e+00 : f32
    %92 = vector.broadcast %cst_79 : f32 to vector<8x128xf32>
    %93 = arith.maximumf %91, %92 : vector<8x128xf32>
    %94 = arith.truncf %93 : vector<8x128xf32> to vector<8x128xbf16>
    %c6_80 = arith.constant 6 : index
    %c0_81 = arith.constant 0 : index
    %c0_82 = arith.constant 0 : index
    %95 = vector.load %arg4[%c6_80, %c0_81, %c0_82] : memref<8x128x128xbf16, #tpu.memory_space<vmem>>, vector<1x128x128xbf16>
    %96 = vector.shape_cast %95 : vector<1x128x128xbf16> to vector<128x128xbf16>
    %cst_83 = arith.constant dense<0.000000e+00> : vector<8x128xf32>
    %97 = tpu.matmul %94, %96, %cst_83 {dimension_numbers = #tpu.dot_dimension_numbers<[1], [0], [0], [1], [0, 0, 1, 1], [], []>} : vector<8x128xbf16>, vector<128x128xbf16>, vector<8x128xf32> -> vector<8x128xf32>
    %98 = arith.addf %84, %97 : vector<8x128xf32>
    %c7 = arith.constant 7 : index
    %c0_84 = arith.constant 0 : index
    %c0_85 = arith.constant 0 : index
    %99 = vector.load %arg1[%c7, %c0_84, %c0_85] : memref<8x8x128xbf16, #tpu.memory_space<vmem>>, vector<1x8x128xbf16>
    %100 = vector.shape_cast %99 : vector<1x8x128xbf16> to vector<8x128xbf16>
    %c0_86 = arith.constant 0 : index
    %c0_87 = arith.constant 0 : index
    %101 = vector.load %arg2[%c0_86, %c0_87] : memref<128x128xbf16, #tpu.memory_space<vmem>>, vector<128x128xbf16>
    %cst_88 = arith.constant dense<0.000000e+00> : vector<8x128xf32>
    %102 = tpu.matmul %100, %101, %cst_88 {dimension_numbers = #tpu.dot_dimension_numbers<[1], [0], [0], [1], [0, 0, 1, 1], [], []>} : vector<8x128xbf16>, vector<128x128xbf16>, vector<8x128xf32> -> vector<8x128xf32>
    %c0_89 = arith.constant 0 : index
    %c0_90 = arith.constant 0 : index
    %103 = vector.load %arg3[%c0_89, %c0_90] : memref<1x128xf32, #tpu.memory_space<vmem>>, vector<1x128xf32>
    %104 = vector.broadcast %103 : vector<1x128xf32> to vector<8x128xf32>
    %105 = arith.addf %102, %104 : vector<8x128xf32>
    %cst_91 = arith.constant 0.000000e+00 : f32
    %106 = vector.broadcast %cst_91 : f32 to vector<8x128xf32>
    %107 = arith.maximumf %105, %106 : vector<8x128xf32>
    %108 = arith.truncf %107 : vector<8x128xf32> to vector<8x128xbf16>
    %c7_92 = arith.constant 7 : index
    %c0_93 = arith.constant 0 : index
    %c0_94 = arith.constant 0 : index
    %109 = vector.load %arg4[%c7_92, %c0_93, %c0_94] : memref<8x128x128xbf16, #tpu.memory_space<vmem>>, vector<1x128x128xbf16>
    %110 = vector.shape_cast %109 : vector<1x128x128xbf16> to vector<128x128xbf16>
    %cst_95 = arith.constant dense<0.000000e+00> : vector<8x128xf32>
    %111 = tpu.matmul %108, %110, %cst_95 {dimension_numbers = #tpu.dot_dimension_numbers<[1], [0], [0], [1], [0, 0, 1, 1], [], []>} : vector<8x128xbf16>, vector<128x128xbf16>, vector<8x128xf32> -> vector<8x128xf32>
    %112 = arith.addf %98, %111 : vector<8x128xf32>
    %c0_96 = arith.constant 0 : index
    %c0_97 = arith.constant 0 : index
    %113 = vector.load %arg5[%c0_96, %c0_97] : memref<1x128xf32, #tpu.memory_space<vmem>>, vector<1x128xf32>
    %114 = vector.broadcast %113 : vector<1x128xf32> to vector<8x128xf32>
    %115 = arith.addf %112, %114 : vector<8x128xf32>
    %cst_98 = arith.constant 0.000000e+00 : f32
    %116 = vector.broadcast %cst_98 : f32 to vector<8x128xf32>
    %117 = arith.maximumf %115, %116 : vector<8x128xf32>
    %118 = arith.truncf %117 : vector<8x128xf32> to vector<8x128xbf16>
    %c0_99 = arith.constant 0 : index
    %c0_100 = arith.constant 0 : index
    %119 = vector.load %arg6[%c0_99, %c0_100] : memref<128x128xbf16, #tpu.memory_space<vmem>>, vector<128x128xbf16>
    %cst_101 = arith.constant dense<0.000000e+00> : vector<8x128xf32>
    %120 = tpu.matmul %118, %119, %cst_101 {dimension_numbers = #tpu.dot_dimension_numbers<[1], [0], [0], [1], [0, 0, 1, 1], [], []>} : vector<8x128xbf16>, vector<128x128xbf16>, vector<8x128xf32> -> vector<8x128xf32>
    %c0_102 = arith.constant 0 : index
    %c0_103 = arith.constant 0 : index
    %121 = vector.load %arg7[%c0_102, %c0_103] : memref<1x128xf32, #tpu.memory_space<vmem>>, vector<1x128xf32>
    %122 = vector.broadcast %121 : vector<1x128xf32> to vector<8x128xf32>
    %123 = arith.addf %120, %122 : vector<8x128xf32>
    %c0_104 = arith.constant 0 : index
    %c0_105 = arith.constant 0 : index
    %124 = vector.load %arg8[%c0_104, %c0_105] : memref<8x128xf32, #tpu.memory_space<vmem>>, vector<8x128xf32>
    tpu.vector_store %arg8[%c0_104, %c0_105], %123 {strides = array<i32>} : memref<8x128xf32, #tpu.memory_space<vmem>>, vector<8x128xf32>,
    return
  }
  func.func @transform_0(%arg0: i32) -> (i32, i32, i32) {
    %c0_i32 = arith.constant 0 : i32
    %c0_i32_0 = arith.constant 0 : i32
    %c0_i32_1 = arith.constant 0 : i32
    return %c0_i32, %arg0, %c0_i32_0 : i32, i32, i32
  }
  func.func @transform_1(%arg0: i32) -> (i32, i32) {
    %c0_i32 = arith.constant 0 : i32
    %c0_i32_0 = arith.constant 0 : i32
    %c0_i32_1 = arith.constant 0 : i32
    return %c0_i32, %c0_i32_0 : i32, i32
  }
  func.func @transform_2(%arg0: i32) -> (i32, i32) {
    %c0_i32 = arith.constant 0 : i32
    %c0_i32_0 = arith.constant 0 : i32
    %c0_i32_1 = arith.constant 0 : i32
    return %c0_i32, %c0_i32_0 : i32, i32
  }
  func.func @transform_3(%arg0: i32) -> (i32, i32, i32) {
    %c0_i32 = arith.constant 0 : i32
    %c0_i32_0 = arith.constant 0 : i32
    %c0_i32_1 = arith.constant 0 : i32
    %c0_i32_2 = arith.constant 0 : i32
    return %c0_i32, %c0_i32_0, %c0_i32_1 : i32, i32, i32
  }
  func.func @transform_4(%arg0: i32) -> (i32, i32) {
    %c0_i32 = arith.constant 0 : i32
    %c0_i32_0 = arith.constant 0 : i32
    %c0_i32_1 = arith.constant 0 : i32
    return %c0_i32, %c0_i32_0 : i32, i32
  }
  func.func @transform_5(%arg0: i32) -> (i32, i32) {
    %c0_i32 = arith.constant 0 : i32
    %c0_i32_0 = arith.constant 0 : i32
    %c0_i32_1 = arith.constant 0 : i32
    return %c0_i32, %c0_i32_0 : i32, i32
  }
  func.func @transform_6(%arg0: i32) -> (i32, i32) {
    %c0_i32 = arith.constant 0 : i32
    %c0_i32_0 = arith.constant 0 : i32
    %c0_i32_1 = arith.constant 0 : i32
    return %c0_i32, %c0_i32_0 : i32, i32
  }
  func.func @transform_7(%arg0: i32) -> (i32, i32) {
    %c0_i32 = arith.constant 0 : i32
    %c0_i32_0 = arith.constant 0 : i32
    return %arg0, %c0_i32 : i32, i32
  }
}

</mosaic_0001>

<llo_original>
// kernel: qnetwork_forward.1
$region0: #{qnetwork_forward.1}
  #allocation0 [shape = 'u32[]', space=smem, size = 0x4, offset = 0x4, fixed_abs, tag = 'smem constant byte address 0x4 - core index']
  #allocation1 [shape = 'u32[72,128]{1,0:T(1,128)}', space=vmem, size = 0x9000, scoped, tag = 'internal scratch']
  %s0 = inlined_call_operand.vmem [shape: bf16[8,8,128], index: 0, kind: input, shape index: {}]
  %s1 = inlined_call_operand.vmem [shape: bf16[128,128], index: 1, kind: input, shape index: {}]
  %s2 = inlined_call_operand.vmem [shape: f32[1,128], index: 2, kind: input, shape index: {}]
  %s3 = inlined_call_operand.hbm [shape: bf16[8,128,128], index: 3, kind: input, shape index: {}]
  %s4 = inlined_call_operand.vmem [shape: f32[1,128], index: 4, kind: input, shape index: {}]
  %s5 = inlined_call_operand.vmem [shape: bf16[128,128], index: 5, kind: input, shape index: {}]
  %s6 = inlined_call_operand.vmem [shape: f32[1,128], index: 6, kind: input, shape index: {}]
  %s7 = inlined_call_operand.vmem [shape: f32[8,128], index: 7, kind: output, shape index: {}]
  %s8 = sld [smem:[#allocation0]]
  $region42: #{qnetwork_forward.1} parent=0
    _
  %s10 = ssub.s32 1, %s8
  %s11 = scalar_select 0, %s10, %s8
  $region1: #{qnetwork_forward.1} parent=0
    #allocation2 [shape = 'u8[262144]{0}', space=vmem, size = 0x40000, scoped, tag = 'input window, operand 3, single buffered']
    #allocation3 [shape = 's32[1]{0}', space=sflag, size = 0x4, scoped, tag = 'scoped memory for qnetwork_forward.1']
    %12 = vsyncpa [#allocation3], 0
    // Predicated region
    $region2: #{qnetwork_forward.1} parent=1 // pred_check
      _
    $region3: #{qnetwork_forward.1} parent=1 // pred_check_branch
      %14 = sbr.rel (0) target = $region5
    $region4: #{qnetwork_forward.1} parent=1 // pred_region
      _
    $region5: #{qnetwork_forward.1} parent=1 // pred_fallthru
      _
    // Predicated region
    $region6: #{qnetwork_forward.1} parent=1 // pred_check
      _
    $region7: #{qnetwork_forward.1} parent=1 // pred_check_branch
      %16 = sbr.rel (0) target = $region9
    $region8: #{qnetwork_forward.1} parent=1 // pred_region
      _
    $region9: #{qnetwork_forward.1} parent=1 // pred_fallthru
      _
    // Predicated region
    $region10: #{qnetwork_forward.1} parent=1 // pred_check
      _
    $region11: #{qnetwork_forward.1} parent=1 // pred_check_branch
      %18 = sbr.rel (0) target = $region13
    $region12: #{qnetwork_forward.1} parent=1 // pred_region
      _
    $region13: #{qnetwork_forward.1} parent=1 // pred_fallthru
      _
    // Predicated region
    $region14: #{qnetwork_forward.1} parent=1 // pred_check
      _
    $region15: #{qnetwork_forward.1} parent=1 // pred_check_branch
      %20 = sbr.rel (0) target = $region17
    $region16: #{qnetwork_forward.1} parent=1 // pred_region
      %22 = vsyncadd [#allocation3], 0
      %s23 = sshll.u32 %s3, 4
      %s24 = int_to_ptr.hbm [resolvable:$true] %s23
      %s25 = sshll.u32 [#allocation2], 4
      %s26 = int_to_ptr.vmem [resolvable:$true] %s25
      %31 = dma.hbm_to_vmem [thread:$0]  %s24, 8192, %s26, [#allocation3], 64, 64, 4
    $region17: #{qnetwork_forward.1} parent=1 // pred_fallthru
      _
    // Predicated region
    $region18: #{qnetwork_forward.1} parent=1 // pred_check
      _
    $region19: #{qnetwork_forward.1} parent=1 // pred_check_branch
      %33 = sbr.rel (0) target = $region21
    $region20: #{qnetwork_forward.1} parent=1 // pred_region
      _
    $region21: #{qnetwork_forward.1} parent=1 // pred_fallthru
      _
    // Predicated region
    $region22: #{qnetwork_forward.1} parent=1 // pred_check
      _
    $region23: #{qnetwork_forward.1} parent=1 // pred_check_branch
      %35 = sbr.rel (0) target = $region25
    $region24: #{qnetwork_forward.1} parent=1 // pred_region
      _
    $region25: #{qnetwork_forward.1} parent=1 // pred_fallthru
      _
    // Predicated region
    $region26: #{qnetwork_forward.1} parent=1 // pred_check
      _
    $region27: #{qnetwork_forward.1} parent=1 // pred_check_branch
      %37 = sbr.rel (0) target = $region29
    $region28: #{qnetwork_forward.1} parent=1 // pred_region
      _
    $region29: #{qnetwork_forward.1} parent=1 // pred_fallthru
      _
    // Predicated region
    $region30: #{qnetwork_forward.1} parent=1 // pred_check
      _
    $region31: #{qnetwork_forward.1} parent=1 // pred_check_branch
      %39 = sbr.rel (0) target = $region33
    $region32: #{qnetwork_forward.1} parent=1 // pred_region
      %41 = dma.done [#allocation3], 8192
    $region33: #{qnetwork_forward.1} parent=1 // pred_fallthru
      _
    %v42 = vld [vmem:[%s0] sm:$0xf]
    %v43 = vld [vmem:[%s1] sm:$0xf]
    %v44 = vld [vmem:[%s1 + $0x4] sm:$0xf]
    %v45 = vld [vmem:[%s1 + $0x8] sm:$0xf]
    %v46 = vld [vmem:[%s1 + $0xc] sm:$0xf]
    %v47 = vld [vmem:[%s1 + $0x10] sm:$0xf]
    %v48 = vld [vmem:[%s1 + $0x14] sm:$0xf]
    %v49 = vld [vmem:[%s1 + $0x18] sm:$0xf]
    %v50 = vld [vmem:[%s1 + $0x1c] sm:$0xf]
    %v51 = vld [vmem:[%s1 + $0x20] sm:$0xf]
    %v52 = vld [vmem:[%s1 + $0x24] sm:$0xf]
    %v53 = vld [vmem:[%s1 + $0x28] sm:$0xf]
    %v54 = vld [vmem:[%s1 + $0x2c] sm:$0xf]
    %v55 = vld [vmem:[%s1 + $0x30] sm:$0xf]
    %v56 = vld [vmem:[%s1 + $0x34] sm:$0xf]
    %v57 = vld [vmem:[%s1 + $0x38] sm:$0xf]
    %v58 = vld [vmem:[%s1 + $0x3c] sm:$0xf]
    %v59 = vld [vmem:[%s2] sm:$0x1]
    %v61 = vperm.slane %v59, 0
    %v79 = vunpack.c.l.b16 %v43
    %v80 = vunpack.c.l.b16 %v44
    %v81 = vunpack.c.l.b16 %v45
    %v82 = vunpack.c.l.b16 %v46
    %v83 = vunpack.c.l.b16 %v47
    %v84 = vunpack.c.l.b16 %v48
    %v85 = vunpack.c.l.b16 %v49
    %v86 = vunpack.c.l.b16 %v50
    %v87 = vunpack.c.l.b16 %v51
    %v88 = vunpack.c.l.b16 %v52
    %v89 = vunpack.c.l.b16 %v53
    %v90 = vunpack.c.l.b16 %v54
    %v91 = vunpack.c.l.b16 %v55
    %v92 = vunpack.c.l.b16 %v56
    %v93 = vunpack.c.l.b16 %v57
    %v94 = vunpack.c.l.b16 %v58
    %v95 = vpack.c.b16 %v80, %v79
    %v96 = vpack.c.b16 %v82, %v81
    %v97 = vpack.c.b16 %v84, %v83
    %v98 = vpack.c.b16 %v86, %v85
    %v99 = vpack.c.b16 %v88, %v87
    %v100 = vpack.c.b16 %v90, %v89
    %v101 = vpack.c.b16 %v92, %v91
    %v102 = vpack.c.b16 %v94, %v93
    %111 = vmatpush.bf16.msra.mxu0 %v102
    %112 = vmatpush.bf16.msra.mxu0 %v101
    %113 = vmatpush.bf16.msra.mxu0 %v100
    %114 = vmatpush.bf16.msra.mxu0 %v99
    %115 = vmatpush.bf16.msra.mxu0 %v98
    %116 = vmatpush.bf16.msra.mxu0 %v97
    %117 = vmatpush.bf16.msra.mxu0 %v96
    %118 = vmatpush.bf16.msra.mxu0 %v95
    %119 = vmatmul.bf16.gmra.mxu0 %v42
    %v120 = vpop.f32.mrf.mxu0
    %v121 = vadd.f32 %v61, %v120
    %v122 = vpop.f32.mrf.mxu0
    %123 = vdwg.mxu0
    %v124 = vmax.f32 %v121, 0.0
    %v125 = vpack.c.bf16 %v124, %v124
    %v126 = vld [vmem:[#allocation2] sm:$0xf]
    %v127 = vld [vmem:[#allocation2 + $0x4] sm:$0xf]
    %v128 = vld [vmem:[#allocation2 + $0x8] sm:$0xf]
    %v129 = vld [vmem:[#allocation2 + $0xc] sm:$0xf]
    %v130 = vld [vmem:[#allocation2 + $0x10] sm:$0xf]
    %v131 = vld [vmem:[#allocation2 + $0x14] sm:$0xf]
    %v132 = vld [vmem:[#allocation2 + $0x18] sm:$0xf]
    %v133 = vld [vmem:[#allocation2 + $0x1c] sm:$0xf]
    %v134 = vld [vmem:[#allocation2 + $0x20] sm:$0xf]
    %v135 = vld [vmem:[#allocation2 + $0x24] sm:$0xf]
    %v136 = vld [vmem:[#allocation2 + $0x28] sm:$0xf]
    %v137 = vld [vmem:[#allocation2 + $0x2c] sm:$0xf]
    %v138 = vld [vmem:[#allocation2 + $0x30] sm:$0xf]
    %v139 = vld [vmem:[#allocation2 + $0x34] sm:$0xf]
    %v140 = vld [vmem:[#allocation2 + $0x38] sm:$0xf]
    %v141 = vld [vmem:[#allocation2 + $0x3c] sm:$0xf]
    %s142 = scalar_lea.vmem %s0, 4
    %v143 = vld [vmem:[%s142] sm:$0xf]
    %144 = vmatpush.bf16.msra.mxu0 %v102
    %145 = vmatpush.bf16.msra.mxu0 %v101
    %146 = vmatpush.bf16.msra.mxu0 %v100
    %147 = vmatpush.bf16.msra.mxu0 %v99
    %148 = vmatpush.bf16.msra.mxu0 %v98
    %149 = vmatpush.bf16.msra.mxu0 %v97
    %150 = vmatpush.bf16.msra.mxu0 %v96
    %151 = vmatpush.bf16.msra.mxu0 %v95
    %152 = vmatmul.bf16.gmra.mxu0 %v143
    %v153 = vpop.f32.mrf.mxu0
    %v154 = vadd.f32 %v61, %v153
    %v155 = vpop.f32.mrf.mxu0
    %156 = vdwg.mxu0
    %v157 = vmax.f32 %v154, 0.0
    %v158 = vpack.c.bf16 %v157, %v157
    %s159 = scalar_lea.vmem [#allocation2], 64
    %v160 = vld [vmem:[%s159] sm:$0xf]
    %v161 = vld [vmem:[%s159 + $0x4] sm:$0xf]
    %v162 = vld [vmem:[%s159 + $0x8] sm:$0xf]
    %v163 = vld [vmem:[%s159 + $0xc] sm:$0xf]
    %v164 = vld [vmem:[%s159 + $0x10] sm:$0xf]
    %v165 = vld [vmem:[%s159 + $0x14] sm:$0xf]
    %v166 = vld [vmem:[%s159 + $0x18] sm:$0xf]
    %v167 = vld [vmem:[%s159 + $0x1c] sm:$0xf]
    %v168 = vld [vmem:[%s159 + $0x20] sm:$0xf]
    %v169 = vld [vmem:[%s159 + $0x24] sm:$0xf]
    %v170 = vld [vmem:[%s159 + $0x28] sm:$0xf]
    %v171 = vld [vmem:[%s159 + $0x2c] sm:$0xf]
    %v172 = vld [vmem:[%s159 + $0x30] sm:$0xf]
    %v173 = vld [vmem:[%s159 + $0x34] sm:$0xf]
    %v174 = vld [vmem:[%s159 + $0x38] sm:$0xf]
    %v175 = vld [vmem:[%s159 + $0x3c] sm:$0xf]
    %v192 = vunpack.c.l.b16 %v160
    %v193 = vunpack.c.l.b16 %v161
    %v194 = vunpack.c.l.b16 %v162
    %v195 = vunpack.c.l.b16 %v163
    %v196 = vunpack.c.l.b16 %v164
    %v197 = vunpack.c.l.b16 %v165
    %v198 = vunpack.c.l.b16 %v166
    %v199 = vunpack.c.l.b16 %v167
    %v200 = vunpack.c.l.b16 %v168
    %v201 = vunpack.c.l.b16 %v169
    %v202 = vunpack.c.l.b16 %v170
    %v203 = vunpack.c.l.b16 %v171
    %v204 = vunpack.c.l.b16 %v172
    %v205 = vunpack.c.l.b16 %v173
    %v206 = vunpack.c.l.b16 %v174
    %v207 = vunpack.c.l.b16 %v175
    %v208 = vpack.c.b16 %v193, %v192
    %v209 = vpack.c.b16 %v195, %v194
    %v210 = vpack.c.b16 %v197, %v196
    %v211 = vpack.c.b16 %v199, %v198
    %v212 = vpack.c.b16 %v201, %v200
    %v213 = vpack.c.b16 %v203, %v202
    %v214 = vpack.c.b16 %v205, %v204
    %v215 = vpack.c.b16 %v207, %v206
    %224 = vmatpush.bf16.msra.mxu0 %v215
    %225 = vmatpush.bf16.msra.mxu0 %v214
    %226 = vmatpush.bf16.msra.mxu0 %v213
    %227 = vmatpush.bf16.msra.mxu0 %v212
    %228 = vmatpush.bf16.msra.mxu0 %v211
    %229 = vmatpush.bf16.msra.mxu0 %v210
    %230 = vmatpush.bf16.msra.mxu0 %v209
    %231 = vmatpush.bf16.msra.mxu0 %v208
    %232 = vmatmul.bf16.gmra.mxu0 %v158
    %v233 = vpop.f32.mrf.mxu0
    %v234 = vadd.f32 0.0, %v233
    %v235 = vpop.f32.mrf.mxu0
    %236 = vdwg.mxu0
    %v253 = vunpack.c.l.b16 %v126
    %v254 = vunpack.c.l.b16 %v127
    %v255 = vunpack.c.l.b16 %v128
    %v256 = vunpack.c.l.b16 %v129
    %v257 = vunpack.c.l.b16 %v130
    %v258 = vunpack.c.l.b16 %v131
    %v259 = vunpack.c.l.b16 %v132
    %v260 = vunpack.c.l.b16 %v133
    %v261 = vunpack.c.l.b16 %v134
    %v262 = vunpack.c.l.b16 %v135
    %v263 = vunpack.c.l.b16 %v136
    %v264 = vunpack.c.l.b16 %v137
    %v265 = vunpack.c.l.b16 %v138
    %v266 = vunpack.c.l.b16 %v139
    %v267 = vunpack.c.l.b16 %v140
    %v268 = vunpack.c.l.b16 %v141
    %v269 = vpack.c.b16 %v254, %v253
    %v270 = vpack.c.b16 %v256, %v255
    %v271 = vpack.c.b16 %v258, %v257
    %v272 = vpack.c.b16 %v260, %v259
    %v273 = vpack.c.b16 %v262, %v261
    %v274 = vpack.c.b16 %v264, %v263
    %v275 = vpack.c.b16 %v266, %v265
    %v276 = vpack.c.b16 %v268, %v267
    %285 = vmatpush.bf16.msra.mxu0 %v276
    %286 = vmatpush.bf16.msra.mxu0 %v275
    %287 = vmatpush.bf16.msra.mxu0 %v274
    %288 = vmatpush.bf16.msra.mxu0 %v273
    %289 = vmatpush.bf16.msra.mxu0 %v272
    %290 = vmatpush.bf16.msra.mxu0 %v271
    %291 = vmatpush.bf16.msra.mxu0 %v270
    %292 = vmatpush.bf16.msra.mxu0 %v269
    %293 = vmatmul.bf16.gmra.mxu0 %v125
    %v294 = vpop.f32.mrf.mxu0
    %v295 = vadd.f32 %v234, %v294
    %v296 = vpop.f32.mrf.mxu0
    %297 = vdwg.mxu0
    %s298 = scalar_lea.vmem %s0, 8
    %v299 = vld [vmem:[%s298] sm:$0xf]
    %300 = vmatpush.bf16.msra.mxu0 %v102
    %301 = vmatpush.bf16.msra.mxu0 %v101
    %302 = vmatpush.bf16.msra.mxu0 %v100
    %303 = vmatpush.bf16.msra.mxu0 %v99
    %304 = vmatpush.bf16.msra.mxu0 %v98
    %305 = vmatpush.bf16.msra.mxu0 %v97
    %306 = vmatpush.bf16.msra.mxu0 %v96
    %307 = vmatpush.bf16.msra.mxu0 %v95
    %308 = vmatmul.bf16.gmra.mxu0 %v299
    %v309 = vpop.f32.mrf.mxu0
    %v310 = vadd.f32 %v61, %v309
    %v311 = vpop.f32.mrf.mxu0
    %312 = vdwg.mxu0
    %v313 = vmax.f32 %v310, 0.0
    %v314 = vpack.c.bf16 %v313, %v313
    %s315 = scalar_lea.vmem [#allocation2], 128
    %v316 = vld [vmem:[%s315] sm:$0xf]
    %v317 = vld [vmem:[%s315 + $0x4] sm:$0xf]
    %v318 = vld [vmem:[%s315 + $0x8] sm:$0xf]
    %v319 = vld [vmem:[%s315 + $0xc] sm:$0xf]
    %v320 = vld [vmem:[%s315 + $0x10] sm:$0xf]
    %v321 = vld [vmem:[%s315 + $0x14] sm:$0xf]
    %v322 = vld [vmem:[%s315 + $0x18] sm:$0xf]
    %v323 = vld [vmem:[%s315 + $0x1c] sm:$0xf]
    %v324 = vld [vmem:[%s315 + $0x20] sm:$0xf]
    %v325 = vld [vmem:[%s315 + $0x24] sm:$0xf]
    %v326 = vld [vmem:[%s315 + $0x28] sm:$0xf]
    %v327 = vld [vmem:[%s315 + $0x2c] sm:$0xf]
    %v328 = vld [vmem:[%s315 + $0x30] sm:$0xf]
    %v329 = vld [vmem:[%s315 + $0x34] sm:$0xf]
    %v330 = vld [vmem:[%s315 + $0x38] sm:$0xf]
    %v331 = vld [vmem:[%s315 + $0x3c] sm:$0xf]
    %v348 = vunpack.c.l.b16 %v316
    %v349 = vunpack.c.l.b16 %v317
    %v350 = vunpack.c.l.b16 %v318
    %v351 = vunpack.c.l.b16 %v319
    %v352 = vunpack.c.l.b16 %v320
    %v353 = vunpack.c.l.b16 %v321
    %v354 = vunpack.c.l.b16 %v322
    %v355 = vunpack.c.l.b16 %v323
    %v356 = vunpack.c.l.b16 %v324
    %v357 = vunpack.c.l.b16 %v325
    %v358 = vunpack.c.l.b16 %v326
    %v359 = vunpack.c.l.b16 %v327
    %v360 = vunpack.c.l.b16 %v328
    %v361 = vunpack.c.l.b16 %v329
    %v362 = vunpack.c.l.b16 %v330
    %v363 = vunpack.c.l.b16 %v331
    %v364 = vpack.c.b16 %v349, %v348
    %v365 = vpack.c.b16 %v351, %v350
    %v366 = vpack.c.b16 %v353, %v352
    %v367 = vpack.c.b16 %v355, %v354
    %v368 = vpack.c.b16 %v357, %v356
    %v369 = vpack.c.b16 %v359, %v358
    %v370 = vpack.c.b16 %v361, %v360
    %v371 = vpack.c.b16 %v363, %v362
    %380 = vmatpush.bf16.msra.mxu0 %v371
    %381 = vmatpush.bf16.msra.mxu0 %v370
    %382 = vmatpush.bf16.msra.mxu0 %v369
    %383 = vmatpush.bf16.msra.mxu0 %v368
    %384 = vmatpush.bf16.msra.mxu0 %v367
    %385 = vmatpush.bf16.msra.mxu0 %v366
    %386 = vmatpush.bf16.msra.mxu0 %v365
    %387 = vmatpush.bf16.msra.mxu0 %v364
    %388 = vmatmul.bf16.gmra.mxu0 %v314
    %v389 = vpop.f32.mrf.mxu0
    %v390 = vadd.f32 0.0, %v389
    %v391 = vpop.f32.mrf.mxu0
    %392 = vdwg.mxu0
    %v393 = vadd.f32 %v295, %v390
    %s394 = scalar_lea.vmem %s0, 12
    %v395 = vld [vmem:[%s394] sm:$0xf]
    %396 = vmatpush.bf16.msra.mxu0 %v102
    %397 = vmatpush.bf16.msra.mxu0 %v101
    %398 = vmatpush.bf16.msra.mxu0 %v100
    %399 = vmatpush.bf16.msra.mxu0 %v99
    %400 = vmatpush.bf16.msra.mxu0 %v98
    %401 = vmatpush.bf16.msra.mxu0 %v97
    %402 = vmatpush.bf16.msra.mxu0 %v96
    %403 = vmatpush.bf16.msra.mxu0 %v95
    %404 = vmatmul.bf16.gmra.mxu0 %v395
    %v405 = vpop.f32.mrf.mxu0
    %v406 = vadd.f32 %v61, %v405
    %v407 = vpop.f32.mrf.mxu0
    %408 = vdwg.mxu0
    %v409 = vmax.f32 %v406, 0.0
    %v410 = vpack.c.bf16 %v409, %v409
    %s411 = scalar_lea.vmem [#allocation2], 192
    %v412 = vld [vmem:[%s411] sm:$0xf]
    %v413 = vld [vmem:[%s411 + $0x4] sm:$0xf]
    %v414 = vld [vmem:[%s411 + $0x8] sm:$0xf]
    %v415 = vld [vmem:[%s411 + $0xc] sm:$0xf]
    %v416 = vld [vmem:[%s411 + $0x10] sm:$0xf]
    %v417 = vld [vmem:[%s411 + $0x14] sm:$0xf]
    %v418 = vld [vmem:[%s411 + $0x18] sm:$0xf]
    %v419 = vld [vmem:[%s411 + $0x1c] sm:$0xf]
    %v420 = vld [vmem:[%s411 + $0x20] sm:$0xf]
    %v421 = vld [vmem:[%s411 + $0x24] sm:$0xf]
    %v422 = vld [vmem:[%s411 + $0x28] sm:$0xf]
    %v423 = vld [vmem:[%s411 + $0x2c] sm:$0xf]
    %v424 = vld [vmem:[%s411 + $0x30] sm:$0xf]
    %v425 = vld [vmem:[%s411 + $0x34] sm:$0xf]
    %v426 = vld [vmem:[%s411 + $0x38] sm:$0xf]
    %v427 = vld [vmem:[%s411 + $0x3c] sm:$0xf]
    %v444 = vunpack.c.l.b16 %v412
    %v445 = vunpack.c.l.b16 %v413
    %v446 = vunpack.c.l.b16 %v414
    %v447 = vunpack.c.l.b16 %v415
    %v448 = vunpack.c.l.b16 %v416
    %v449 = vunpack.c.l.b16 %v417
    %v450 = vunpack.c.l.b16 %v418
    %v451 = vunpack.c.l.b16 %v419
    %v452 = vunpack.c.l.b16 %v420
    %v453 = vunpack.c.l.b16 %v421
    %v454 = vunpack.c.l.b16 %v422
    %v455 = vunpack.c.l.b16 %v423
    %v456 = vunpack.c.l.b16 %v424
    %v457 = vunpack.c.l.b16 %v425
    %v458 = vunpack.c.l.b16 %v426
    %v459 = vunpack.c.l.b16 %v427
    %v460 = vpack.c.b16 %v445, %v444
    %v461 = vpack.c.b16 %v447, %v446
    %v462 = vpack.c.b16 %v449, %v448
    %v463 = vpack.c.b16 %v451, %v450
    %v464 = vpack.c.b16 %v453, %v452
    %v465 = vpack.c.b16 %v455, %v454
    %v466 = vpack.c.b16 %v457, %v456
    %v467 = vpack.c.b16 %v459, %v458
    %476 = vmatpush.bf16.msra.mxu0 %v467
    %477 = vmatpush.bf16.msra.mxu0 %v466
    %478 = vmatpush.bf16.msra.mxu0 %v465
    %479 = vmatpush.bf16.msra.mxu0 %v464
    %480 = vmatpush.bf16.msra.mxu0 %v463
    %481 = vmatpush.bf16.msra.mxu0 %v462
    %482 = vmatpush.bf16.msra.mxu0 %v461
    %483 = vmatpush.bf16.msra.mxu0 %v460
    %484 = vmatmul.bf16.gmra.mxu0 %v410
    %v485 = vpop.f32.mrf.mxu0
    %v486 = vadd.f32 0.0, %v485
    %v487 = vpop.f32.mrf.mxu0
    %488 = vdwg.mxu0
    %v489 = vadd.f32 %v393, %v486
    %s490 = scalar_lea.vmem %s0, 16
    %v491 = vld [vmem:[%s490] sm:$0xf]
    %492 = vmatpush.bf16.msra.mxu0 %v102
    %493 = vmatpush.bf16.msra.mxu0 %v101
    %494 = vmatpush.bf16.msra.mxu0 %v100
    %495 = vmatpush.bf16.msra.mxu0 %v99
    %496 = vmatpush.bf16.msra.mxu0 %v98
    %497 = vmatpush.bf16.msra.mxu0 %v97
    %498 = vmatpush.bf16.msra.mxu0 %v96
    %499 = vmatpush.bf16.msra.mxu0 %v95
    %500 = vmatmul.bf16.gmra.mxu0 %v491
    %v501 = vpop.f32.mrf.mxu0
    %v502 = vadd.f32 %v61, %v501
    %v503 = vpop.f32.mrf.mxu0
    %504 = vdwg.mxu0
    %v505 = vmax.f32 %v502, 0.0
    %v506 = vpack.c.bf16 %v505, %v505
    %s507 = scalar_lea.vmem [#allocation2], 256
    %v508 = vld [vmem:[%s507] sm:$0xf]
    %v509 = vld [vmem:[%s507 + $0x4] sm:$0xf]
    %v510 = vld [vmem:[%s507 + $0x8] sm:$0xf]
    %v511 = vld [vmem:[%s507 + $0xc] sm:$0xf]
    %v512 = vld [vmem:[%s507 + $0x10] sm:$0xf]
    %v513 = vld [vmem:[%s507 + $0x14] sm:$0xf]
    %v514 = vld [vmem:[%s507 + $0x18] sm:$0xf]
    %v515 = vld [vmem:[%s507 + $0x1c] sm:$0xf]
    %v516 = vld [vmem:[%s507 + $0x20] sm:$0xf]
    %v517 = vld [vmem:[%s507 + $0x24] sm:$0xf]
    %v518 = vld [vmem:[%s507 + $0x28] sm:$0xf]
    %v519 = vld [vmem:[%s507 + $0x2c] sm:$0xf]
    %v520 = vld [vmem:[%s507 + $0x30] sm:$0xf]
    %v521 = vld [vmem:[%s507 + $0x34] sm:$0xf]
    %v522 = vld [vmem:[%s507 + $0x38] sm:$0xf]
    %v523 = vld [vmem:[%s507 + $0x3c] sm:$0xf]
    %v540 = vunpack.c.l.b16 %v508
    %v541 = vunpack.c.l.b16 %v509
    %v542 = vunpack.c.l.b16 %v510
    %v543 = vunpack.c.l.b16 %v511
    %v544 = vunpack.c.l.b16 %v512
    %v545 = vunpack.c.l.b16 %v513
    %v546 = vunpack.c.l.b16 %v514
    %v547 = vunpack.c.l.b16 %v515
    %v548 = vunpack.c.l.b16 %v516
    %v549 = vunpack.c.l.b16 %v517
    %v550 = vunpack.c.l.b16 %v518
    %v551 = vunpack.c.l.b16 %v519
    %v552 = vunpack.c.l.b16 %v520
    %v553 = vunpack.c.l.b16 %v521
    %v554 = vunpack.c.l.b16 %v522
    %v555 = vunpack.c.l.b16 %v523
    %v556 = vpack.c.b16 %v541, %v540
    %v557 = vpack.c.b16 %v543, %v542
    %v558 = vpack.c.b16 %v545, %v544
    %v559 = vpack.c.b16 %v547, %v546
    %v560 = vpack.c.b16 %v549, %v548
    %v561 = vpack.c.b16 %v551, %v550
    %v562 = vpack.c.b16 %v553, %v552
    %v563 = vpack.c.b16 %v555, %v554
    %572 = vmatpush.bf16.msra.mxu0 %v563
    %573 = vmatpush.bf16.msra.mxu0 %v562
    %574 = vmatpush.bf16.msra.mxu0 %v561
    %575 = vmatpush.bf16.msra.mxu0 %v560
    %576 = vmatpush.bf16.msra.mxu0 %v559
    %577 = vmatpush.bf16.msra.mxu0 %v558
    %578 = vmatpush.bf16.msra.mxu0 %v557
    %579 = vmatpush.bf16.msra.mxu0 %v556
    %580 = vmatmul.bf16.gmra.mxu0 %v506
    %v581 = vpop.f32.mrf.mxu0
    %v582 = vadd.f32 0.0, %v581
    %v583 = vpop.f32.mrf.mxu0
    %584 = vdwg.mxu0
    %v585 = vadd.f32 %v489, %v582
    %s586 = scalar_lea.vmem %s0, 20
    %v587 = vld [vmem:[%s586] sm:$0xf]
    %588 = vmatpush.bf16.msra.mxu0 %v102
    %589 = vmatpush.bf16.msra.mxu0 %v101
    %590 = vmatpush.bf16.msra.mxu0 %v100
    %591 = vmatpush.bf16.msra.mxu0 %v99
    %592 = vmatpush.bf16.msra.mxu0 %v98
    %593 = vmatpush.bf16.msra.mxu0 %v97
    %594 = vmatpush.bf16.msra.mxu0 %v96
    %595 = vmatpush.bf16.msra.mxu0 %v95
    %596 = vmatmul.bf16.gmra.mxu0 %v587
    %v597 = vpop.f32.mrf.mxu0
    %v598 = vadd.f32 %v61, %v597
    %v599 = vpop.f32.mrf.mxu0
    %600 = vdwg.mxu0
    %v601 = vmax.f32 %v598, 0.0
    %v602 = vpack.c.bf16 %v601, %v601
    %s603 = scalar_lea.vmem [#allocation2], 320
    %v604 = vld [vmem:[%s603] sm:$0xf]
    %v605 = vld [vmem:[%s603 + $0x4] sm:$0xf]
    %v606 = vld [vmem:[%s603 + $0x8] sm:$0xf]
    %v607 = vld [vmem:[%s603 + $0xc] sm:$0xf]
    %v608 = vld [vmem:[%s603 + $0x10] sm:$0xf]
    %v609 = vld [vmem:[%s603 + $0x14] sm:$0xf]
    %v610 = vld [vmem:[%s603 + $0x18] sm:$0xf]
    %v611 = vld [vmem:[%s603 + $0x1c] sm:$0xf]
    %v612 = vld [vmem:[%s603 + $0x20] sm:$0xf]
    %v613 = vld [vmem:[%s603 + $0x24] sm:$0xf]
    %v614 = vld [vmem:[%s603 + $0x28] sm:$0xf]
    %v615 = vld [vmem:[%s603 + $0x2c] sm:$0xf]
    %v616 = vld [vmem:[%s603 + $0x30] sm:$0xf]
    %v617 = vld [vmem:[%s603 + $0x34] sm:$0xf]
    %v618 = vld [vmem:[%s603 + $0x38] sm:$0xf]
    %v619 = vld [vmem:[%s603 + $0x3c] sm:$0xf]
    %v636 = vunpack.c.l.b16 %v604
    %v637 = vunpack.c.l.b16 %v605
    %v638 = vunpack.c.l.b16 %v606
    %v639 = vunpack.c.l.b16 %v607
    %v640 = vunpack.c.l.b16 %v608
    %v641 = vunpack.c.l.b16 %v609
    %v642 = vunpack.c.l.b16 %v610
    %v643 = vunpack.c.l.b16 %v611
    %v644 = vunpack.c.l.b16 %v612
    %v645 = vunpack.c.l.b16 %v613
    %v646 = vunpack.c.l.b16 %v614
    %v647 = vunpack.c.l.b16 %v615
    %v648 = vunpack.c.l.b16 %v616
    %v649 = vunpack.c.l.b16 %v617
    %v650 = vunpack.c.l.b16 %v618
    %v651 = vunpack.c.l.b16 %v619
    %v652 = vpack.c.b16 %v637, %v636
    %v653 = vpack.c.b16 %v639, %v638
    %v654 = vpack.c.b16 %v641, %v640
    %v655 = vpack.c.b16 %v643, %v642
    %v656 = vpack.c.b16 %v645, %v644
    %v657 = vpack.c.b16 %v647, %v646
    %v658 = vpack.c.b16 %v649, %v648
    %v659 = vpack.c.b16 %v651, %v650
    %668 = vmatpush.bf16.msra.mxu0 %v659
    %669 = vmatpush.bf16.msra.mxu0 %v658
    %670 = vmatpush.bf16.msra.mxu0 %v657
    %671 = vmatpush.bf16.msra.mxu0 %v656
    %672 = vmatpush.bf16.msra.mxu0 %v655
    %673 = vmatpush.bf16.msra.mxu0 %v654
    %674 = vmatpush.bf16.msra.mxu0 %v653
    %675 = vmatpush.bf16.msra.mxu0 %v652
    %676 = vmatmul.bf16.gmra.mxu0 %v602
    %v677 = vpop.f32.mrf.mxu0
    %v678 = vadd.f32 0.0, %v677
    %v679 = vpop.f32.mrf.mxu0
    %680 = vdwg.mxu0
    %v681 = vadd.f32 %v585, %v678
    %s682 = scalar_lea.vmem %s0, 24
    %v683 = vld [vmem:[%s682] sm:$0xf]
    %684 = vmatpush.bf16.msra.mxu0 %v102
    %685 = vmatpush.bf16.msra.mxu0 %v101
    %686 = vmatpush.bf16.msra.mxu0 %v100
    %687 = vmatpush.bf16.msra.mxu0 %v99
    %688 = vmatpush.bf16.msra.mxu0 %v98
    %689 = vmatpush.bf16.msra.mxu0 %v97
    %690 = vmatpush.bf16.msra.mxu0 %v96
    %691 = vmatpush.bf16.msra.mxu0 %v95
    %692 = vmatmul.bf16.gmra.mxu0 %v683
    %v693 = vpop.f32.mrf.mxu0
    %v694 = vadd.f32 %v61, %v693
    %v695 = vpop.f32.mrf.mxu0
    %696 = vdwg.mxu0
    %v697 = vmax.f32 %v694, 0.0
    %v698 = vpack.c.bf16 %v697, %v697
    %s699 = scalar_lea.vmem [#allocation2], 384
    %v700 = vld [vmem:[%s699] sm:$0xf]
    %v701 = vld [vmem:[%s699 + $0x4] sm:$0xf]
    %v702 = vld [vmem:[%s699 + $0x8] sm:$0xf]
    %v703 = vld [vmem:[%s699 + $0xc] sm:$0xf]
    %v704 = vld [vmem:[%s699 + $0x10] sm:$0xf]
    %v705 = vld [vmem:[%s699 + $0x14] sm:$0xf]
    %v706 = vld [vmem:[%s699 + $0x18] sm:$0xf]
    %v707 = vld [vmem:[%s699 + $0x1c] sm:$0xf]
    %v708 = vld [vmem:[%s699 + $0x20] sm:$0xf]
    %v709 = vld [vmem:[%s699 + $0x24] sm:$0xf]
    %v710 = vld [vmem:[%s699 + $0x28] sm:$0xf]
    %v711 = vld [vmem:[%s699 + $0x2c] sm:$0xf]
    %v712 = vld [vmem:[%s699 + $0x30] sm:$0xf]
    %v713 = vld [vmem:[%s699 + $0x34] sm:$0xf]
    %v714 = vld [vmem:[%s699 + $0x38] sm:$0xf]
    %v715 = vld [vmem:[%s699 + $0x3c] sm:$0xf]
    %v732 = vunpack.c.l.b16 %v700
    %v733 = vunpack.c.l.b16 %v701
    %v734 = vunpack.c.l.b16 %v702
    %v735 = vunpack.c.l.b16 %v703
    %v736 = vunpack.c.l.b16 %v704
    %v737 = vunpack.c.l.b16 %v705
    %v738 = vunpack.c.l.b16 %v706
    %v739 = vunpack.c.l.b16 %v707
    %v740 = vunpack.c.l.b16 %v708
    %v741 = vunpack.c.l.b16 %v709
    %v742 = vunpack.c.l.b16 %v710
    %v743 = vunpack.c.l.b16 %v711
    %v744 = vunpack.c.l.b16 %v712
    %v745 = vunpack.c.l.b16 %v713
    %v746 = vunpack.c.l.b16 %v714
    %v747 = vunpack.c.l.b16 %v715
    %v748 = vpack.c.b16 %v733, %v732
    %v749 = vpack.c.b16 %v735, %v734
    %v750 = vpack.c.b16 %v737, %v736
    %v751 = vpack.c.b16 %v739, %v738
    %v752 = vpack.c.b16 %v741, %v740
    %v753 = vpack.c.b16 %v743, %v742
    %v754 = vpack.c.b16 %v745, %v744
    %v755 = vpack.c.b16 %v747, %v746
    %764 = vmatpush.bf16.msra.mxu0 %v755
    %765 = vmatpush.bf16.msra.mxu0 %v754
    %766 = vmatpush.bf16.msra.mxu0 %v753
    %767 = vmatpush.bf16.msra.mxu0 %v752
    %768 = vmatpush.bf16.msra.mxu0 %v751
    %769 = vmatpush.bf16.msra.mxu0 %v750
    %770 = vmatpush.bf16.msra.mxu0 %v749
    %771 = vmatpush.bf16.msra.mxu0 %v748
    %772 = vmatmul.bf16.gmra.mxu0 %v698
    %v773 = vpop.f32.mrf.mxu0
    %v774 = vadd.f32 0.0, %v773
    %v775 = vpop.f32.mrf.mxu0
    %776 = vdwg.mxu0
    %v777 = vadd.f32 %v681, %v774
    %s778 = scalar_lea.vmem %s0, 28
    %v779 = vld [vmem:[%s778] sm:$0xf]
    %780 = vmatpush.bf16.msra.mxu0 %v102
    %781 = vmatpush.bf16.msra.mxu0 %v101
    %782 = vmatpush.bf16.msra.mxu0 %v100
    %783 = vmatpush.bf16.msra.mxu0 %v99
    %784 = vmatpush.bf16.msra.mxu0 %v98
    %785 = vmatpush.bf16.msra.mxu0 %v97
    %786 = vmatpush.bf16.msra.mxu0 %v96
    %787 = vmatpush.bf16.msra.mxu0 %v95
    %788 = vmatmul.bf16.gmra.mxu0 %v779
    %v789 = vpop.f32.mrf.mxu0
    %v790 = vadd.f32 %v61, %v789
    %v791 = vpop.f32.mrf.mxu0
    %792 = vdwg.mxu0
    %v793 = vmax.f32 %v790, 0.0
    %v794 = vpack.c.bf16 %v793, %v793
    %s795 = scalar_lea.vmem [#allocation2], 448
    %v796 = vld [vmem:[%s795] sm:$0xf]
    %v797 = vld [vmem:[%s795 + $0x4] sm:$0xf]
    %v798 = vld [vmem:[%s795 + $0x8] sm:$0xf]
    %v799 = vld [vmem:[%s795 + $0xc] sm:$0xf]
    %v800 = vld [vmem:[%s795 + $0x10] sm:$0xf]
    %v801 = vld [vmem:[%s795 + $0x14] sm:$0xf]
    %v802 = vld [vmem:[%s795 + $0x18] sm:$0xf]
    %v803 = vld [vmem:[%s795 + $0x1c] sm:$0xf]
    %v804 = vld [vmem:[%s795 + $0x20] sm:$0xf]
    %v805 = vld [vmem:[%s795 + $0x24] sm:$0xf]
    %v806 = vld [vmem:[%s795 + $0x28] sm:$0xf]
    %v807 = vld [vmem:[%s795 + $0x2c] sm:$0xf]
    %v808 = vld [vmem:[%s795 + $0x30] sm:$0xf]
    %v809 = vld [vmem:[%s795 + $0x34] sm:$0xf]
    %v810 = vld [vmem:[%s795 + $0x38] sm:$0xf]
    %v811 = vld [vmem:[%s795 + $0x3c] sm:$0xf]
    %v828 = vunpack.c.l.b16 %v796
    %v829 = vunpack.c.l.b16 %v797
    %v830 = vunpack.c.l.b16 %v798
    %v831 = vunpack.c.l.b16 %v799
    %v832 = vunpack.c.l.b16 %v800
    %v833 = vunpack.c.l.b16 %v801
    %v834 = vunpack.c.l.b16 %v802
    %v835 = vunpack.c.l.b16 %v803
    %v836 = vunpack.c.l.b16 %v804
    %v837 = vunpack.c.l.b16 %v805
    %v838 = vunpack.c.l.b16 %v806
    %v839 = vunpack.c.l.b16 %v807
    %v840 = vunpack.c.l.b16 %v808
    %v841 = vunpack.c.l.b16 %v809
    %v842 = vunpack.c.l.b16 %v810
    %v843 = vunpack.c.l.b16 %v811
    %v844 = vpack.c.b16 %v829, %v828
    %v845 = vpack.c.b16 %v831, %v830
    %v846 = vpack.c.b16 %v833, %v832
    %v847 = vpack.c.b16 %v835, %v834
    %v848 = vpack.c.b16 %v837, %v836
    %v849 = vpack.c.b16 %v839, %v838
    %v850 = vpack.c.b16 %v841, %v840
    %v851 = vpack.c.b16 %v843, %v842
    %860 = vmatpush.bf16.msra.mxu0 %v851
    %861 = vmatpush.bf16.msra.mxu0 %v850
    %862 = vmatpush.bf16.msra.mxu0 %v849
    %863 = vmatpush.bf16.msra.mxu0 %v848
    %864 = vmatpush.bf16.msra.mxu0 %v847
    %865 = vmatpush.bf16.msra.mxu0 %v846
    %866 = vmatpush.bf16.msra.mxu0 %v845
    %867 = vmatpush.bf16.msra.mxu0 %v844
    %868 = vmatmul.bf16.gmra.mxu0 %v794
    %v869 = vpop.f32.mrf.mxu0
    %v870 = vadd.f32 0.0, %v869
    %v871 = vpop.f32.mrf.mxu0
    %872 = vdwg.mxu0
    %v873 = vadd.f32 %v777, %v870
    %v874 = vld [vmem:[%s4] sm:$0x1]
    %v876 = vperm.slane %v874, 0
    %v878 = vadd.f32 %v873, %v876
    %v879 = vmax.f32 %v878, 0.0
    %v880 = vpack.c.bf16 %v879, %v879
    %v881 = vld [vmem:[%s5] sm:$0xf]
    %v882 = vld [vmem:[%s5 + $0x4] sm:$0xf]
    %v883 = vld [vmem:[%s5 + $0x8] sm:$0xf]
    %v884 = vld [vmem:[%s5 + $0xc] sm:$0xf]
    %v885 = vld [vmem:[%s5 + $0x10] sm:$0xf]
    %v886 = vld [vmem:[%s5 + $0x14] sm:$0xf]
    %v887 = vld [vmem:[%s5 + $0x18] sm:$0xf]
    %v888 = vld [vmem:[%s5 + $0x1c] sm:$0xf]
    %v889 = vld [vmem:[%s5 + $0x20] sm:$0xf]
    %v890 = vld [vmem:[%s5 + $0x24] sm:$0xf]
    %v891 = vld [vmem:[%s5 + $0x28] sm:$0xf]
    %v892 = vld [vmem:[%s5 + $0x2c] sm:$0xf]
    %v893 = vld [vmem:[%s5 + $0x30] sm:$0xf]
    %v894 = vld [vmem:[%s5 + $0x34] sm:$0xf]
    %v895 = vld [vmem:[%s5 + $0x38] sm:$0xf]
    %v896 = vld [vmem:[%s5 + $0x3c] sm:$0xf]
    %v897 = vld [vmem:[%s6] sm:$0x1]
    %v899 = vperm.slane %v897, 0
    %v917 = vunpack.c.l.b16 %v881
    %v918 = vunpack.c.l.b16 %v882
    %v919 = vunpack.c.l.b16 %v883
    %v920 = vunpack.c.l.b16 %v884
    %v921 = vunpack.c.l.b16 %v885
    %v922 = vunpack.c.l.b16 %v886
    %v923 = vunpack.c.l.b16 %v887
    %v924 = vunpack.c.l.b16 %v888
    %v925 = vunpack.c.l.b16 %v889
    %v926 = vunpack.c.l.b16 %v890
    %v927 = vunpack.c.l.b16 %v891
    %v928 = vunpack.c.l.b16 %v892
    %v929 = vunpack.c.l.b16 %v893
    %v930 = vunpack.c.l.b16 %v894
    %v931 = vunpack.c.l.b16 %v895
    %v932 = vunpack.c.l.b16 %v896
    %v933 = vpack.c.b16 %v918, %v917
    %v934 = vpack.c.b16 %v920, %v919
    %v935 = vpack.c.b16 %v922, %v921
    %v936 = vpack.c.b16 %v924, %v923
    %v937 = vpack.c.b16 %v926, %v925
    %v938 = vpack.c.b16 %v928, %v927
    %v939 = vpack.c.b16 %v930, %v929
    %v940 = vpack.c.b16 %v932, %v931
    %949 = vmatpush.bf16.msra.mxu0 %v940
    %950 = vmatpush.bf16.msra.mxu0 %v939
    %951 = vmatpush.bf16.msra.mxu0 %v938
    %952 = vmatpush.bf16.msra.mxu0 %v937
    %953 = vmatpush.bf16.msra.mxu0 %v936
    %954 = vmatpush.bf16.msra.mxu0 %v935
    %955 = vmatpush.bf16.msra.mxu0 %v934
    %956 = vmatpush.bf16.msra.mxu0 %v933
    %957 = vmatmul.bf16.gmra.mxu0 %v880
    %v958 = vpop.f32.mrf.mxu0
    %v959 = vadd.f32 %v899, %v958
    %v960 = vpop.f32.mrf.mxu0
    %961 = vdwg.mxu0
    %962 = vst [vmem:[%s7] sm:$0xff] %v959
    // Predicated region
    $region34: #{qnetwork_forward.1} parent=1 // pred_check
      _
    $region35: #{qnetwork_forward.1} parent=1 // pred_check_branch
      %964 = sbr.rel (0) target = $region37
    $region36: #{qnetwork_forward.1} parent=1 // pred_region
      _
    $region37: #{qnetwork_forward.1} parent=1 // pred_fallthru
      _
    // Predicated region
    $region38: #{qnetwork_forward.1} parent=1 // pred_check
      _
    $region39: #{qnetwork_forward.1} parent=1 // pred_check_branch
      %966 = sbr.rel (0) target = $region41
    $region40: #{qnetwork_forward.1} parent=1 // pred_region
      _
    $region41: #{qnetwork_forward.1} parent=1 // pred_fallthru
      _
    %967 = vsyncpa [#allocation3], 1

</llo_original>
